<compile_context>
chip_gen: v7x
topology: tpu7x:2x2x1
jax: 0.10.0
libtpu: 0.0.40
codegen_flags: <defaults>
</compile_context>

<pallas_src>
import functools

import jax
import jax.numpy as jnp
from jax.experimental import pallas as pl
from jax.experimental.pallas import tpu as pltpu


def _round_up(a, m):
    return (a + m - 1) // m * m


def _topk_select(feats, k):
    """Exact per-row top-k (keep values, zero the rest) for non-negative `feats`.

    k iterations of: take row max, tie-break on smallest lane index, mark the picked
    lane with a sentinel (-1, impossible after ReLU) and exclude it. Selection mask is
    recovered from the sentinel after the loop (single loop-carried array).
    """
    Hp = feats.shape[-1]
    lane = jax.lax.broadcasted_iota(jnp.int32, feats.shape, 1)
    sentinel = jnp.float32(-1.0)

    def body(_, work):
        cur_max = jnp.max(work, axis=-1, keepdims=True)                 # XLU reduce 1
        at_max = work == cur_max
        first = jnp.min(jnp.where(at_max, lane, Hp),
                        axis=-1, keepdims=True)                         # XLU reduce 2
        return jnp.where(lane == first, sentinel, work)

    work = jax.lax.fori_loop(0, k, body, feats, unroll=(k <= 16))
    return jnp.where(work == sentinel, feats, 0.0)


def _sae_kernel(x_ref, wenc_ref, benc_ref, wdec_ref, sparse_ref, recon_ref,
                *, k, n_sub):
    # Contract last axes of both operands: x(B,Dp) . W_enc(Hp,Dp) -> (B,Hp),
    # sparse(B,Hp) . W_dec(Dp,Hp) -> (B,Dp). No XLU transpose; MXU reads the PyTorch
    # (out, in) layout directly. Operands bf16, accumulation f32.
    dn = (((1,), (1,)), ((), ()))
    w_enc = wenc_ref[...]                       # (Hp, Dp) bf16, VMEM-resident
    w_dec = wdec_ref[...]                       # (Dp, Hp) bf16, VMEM-resident
    b_enc = benc_ref[...]                       # (1, Hp)  f32

    rows = x_ref.shape[0] // n_sub
    # Static sub-tile loop: independent encoder->topk->decoder chains let the VLIW
    # scheduler overlap one sub-tile's decoder (MXU) with another's top-k (VPU/XLU).
    for s in range(n_sub):
        r0 = s * rows
        xs = x_ref[pl.ds(r0, rows), :]                                   # bf16
        feats = jax.lax.dot_general(xs, w_enc, dn,
                                    preferred_element_type=jnp.float32)
        feats = jnp.maximum(feats + b_enc, 0.0)                          # (rows, Hp) f32

        sparse = feats if k is None else _topk_select(feats, k)

        sparse_ref[pl.ds(r0, rows), :] = sparse.astype(sparse_ref.dtype)
        recon = jax.lax.dot_general(sparse.astype(w_dec.dtype), w_dec, dn,
                                    preferred_element_type=jnp.float32)
        recon_ref[pl.ds(r0, rows), :] = recon.astype(recon_ref.dtype)


def prepare_sae_params(w_enc, b_enc, w_dec):
    """One-time weight prep (hoisted out of the forward path): pad last dims to
    multiples of 128 (lane-dense, unmasked vst / full MXU N) and cast to bf16.
    Padded hidden columns give ReLU(0)=0 features and zero decoder rows, so outputs
    sliced back to (B, H)/(B, D) are value-identical."""
    H, D = w_enc.shape
    assert b_enc.shape == (H,) and w_dec.shape == (D, H)
    Dp = _round_up(D, 128)
    Hp = _round_up(H, 128)
    bf16 = jnp.bfloat16
    if (Dp, Hp) == (D, H):
        wep = w_enc.astype(bf16)
        wdp = w_dec.astype(bf16)
        bep = b_enc.reshape(1, H).astype(jnp.float32)
    else:
        wep = jnp.zeros((Hp, Dp), bf16).at[:H, :D].set(w_enc.astype(bf16))
        wdp = jnp.zeros((Dp, Hp), bf16).at[:D, :H].set(w_dec.astype(bf16))
        bep = jnp.zeros((1, Hp), jnp.float32).at[0, :H].set(b_enc.astype(jnp.float32))
    return wep, bep, wdp


@functools.partial(jax.jit, static_argnames=("d", "h", "k", "batch_tile"))
def topk_sae_forward(x, w_enc_p, b_enc_p, w_dec_p, *, d, h, k=None, batch_tile=256):
    """Pallas TPU forward for TopKSparseAutoencoder.

    x:                  (B, d) float
    w_enc_p/b_enc_p/w_dec_p: padded/cast params from prepare_sae_params
    Returns (sparse_features (B, h), reconstruction (B, d)), float32.
    """
    Hp, Dp = w_enc_p.shape
    B = x.shape[0]
    assert x.shape[1] == d and w_dec_p.shape == (Dp, Hp) and b_enc_p.shape == (1, Hp)

    # Batch tile: sublane-aligned; cap so the "parallel" grid has >= 2 steps whenever
    # the batch is splittable (keeps both v7x TensorCores busy).
    TB = min(batch_tile, _round_up(B, 8))
    if B > 8 and _round_up(B, TB) // TB < 2:
        TB = max(8, _round_up((TB + 1) // 2, 8))
    Bp = _round_up(B, TB)
    n_sub = 2 if (TB >= 256 and TB % 16 == 0) else 1

    xb = x.astype(jnp.bfloat16)
    if (Bp, Dp) != (B, d):
        xp = jnp.zeros((Bp, Dp), jnp.bfloat16).at[:B, :d].set(xb)
    else:
        xp = xb

    grid = (Bp // TB,)
    kernel = functools.partial(_sae_kernel, k=k, n_sub=n_sub)

    # Advisory cost for XLA scheduling.
    flops = 4 * Bp * Dp * Hp                               # encoder + decoder MACs
    bytes_accessed = (2 * Bp * Dp            # x (bf16 in)
                      + 2 * 2 * Hp * Dp      # both bf16 weights
                      + 4 * Hp               # bias
                      + 4 * Bp * Hp          # sparse out (f32)
                      + 4 * Bp * Dp)         # recon out (f32)

    # Scoped-VMEM budget: single-buffered bf16 weights + f32 bias, double-buffered
    # activations (x bf16, sparse/recon f32), top-k working arrays, plus headroom.
    weight_bytes = 2 * (2 * Hp * Dp) + 4 * Hp
    act_bytes = 2 * (2 * TB * Dp + 4 * TB * Hp + 4 * TB * Dp)
    scratch_bytes = 4 * 4 * TB * Hp
    vmem_bytes = int(1.35 * (weight_bytes + act_bytes + scratch_bytes)) + (2 << 20)
    vmem_bytes = min(max(vmem_bytes, 32 << 20), 96 << 20)

    sparse_p, recon_p = pl.pallas_call(
        kernel,
        out_shape=(jax.ShapeDtypeStruct((Bp, Hp), jnp.float32),
                   jax.ShapeDtypeStruct((Bp, Dp), jnp.float32)),
        grid=grid,
        in_specs=[
            pl.BlockSpec((TB, Dp), lambda i: (i, 0)),          # x: tiled over batch
            pl.BlockSpec((Hp, Dp), lambda i: (0, 0),           # W_enc: resident
                         pipeline_mode=pl.Buffered(1)),
            pl.BlockSpec((1, Hp), lambda i: (0, 0),            # b_enc: resident
                         pipeline_mode=pl.Buffered(1)),
            pl.BlockSpec((Dp, Hp), lambda i: (0, 0),           # W_dec: resident
                         pipeline_mode=pl.Buffered(1)),
        ],
        out_specs=(
            pl.BlockSpec((TB, Hp), lambda i: (i, 0)),
            pl.BlockSpec((TB, Dp), lambda i: (i, 0)),
        ),
        compiler_params=pltpu.CompilerParams(
            dimension_semantics=("parallel",),
            vmem_limit_bytes=vmem_bytes),
        cost_estimate=pl.CostEstimate(flops=flops, transcendentals=0,
                                      bytes_accessed=bytes_accessed),
    )(xp, w_enc_p, b_enc_p, w_dec_p)

    return sparse_p[:B, :h], recon_p[:B, :d]


def _reference_forward(x, w_enc, b_enc, w_dec, k):
    """Pure-JAX reference mirroring the kernel's bf16-operand / f32-accumulate dots."""
    dn = (((1,), (1,)), ((), ()))
    feats = jax.lax.dot_general(x.astype(jnp.bfloat16), w_enc.astype(jnp.bfloat16),
                                dn, preferred_element_type=jnp.float32) + b_enc
    feats = jnp.maximum(feats, 0.0)
    if k is None:
        sparse = feats
    else:
        vals, idx = jax.lax.top_k(feats, k)
        rows = jnp.arange(feats.shape[0])[:, None]
        sparse = jnp.zeros_like(feats).at[rows, idx].set(vals)
    recon = jax.lax.dot_general(sparse.astype(jnp.bfloat16), w_dec.astype(jnp.bfloat16),
                                dn, preferred_element_type=jnp.float32)
    return sparse, recon


if __name__ == "__main__":
    B, input_dim, hidden_dim, k = 8, 32, 64, 8

    key = jax.random.PRNGKey(0)
    kx, kwe, kbe, kwd = jax.random.split(key, 4)
    x = jax.random.normal(kx, (B, input_dim), dtype=jnp.float32)
    w_enc = jax.random.normal(kwe, (hidden_dim, input_dim), dtype=jnp.float32) * 0.2
    b_enc = jax.random.normal(kbe, (hidden_dim,), dtype=jnp.float32) * 0.1
    w_dec = jax.random.normal(kwd, (input_dim, hidden_dim), dtype=jnp.float32) * 0.2

    # One-time weight prep (outside the forward path).
    w_enc_p, b_enc_p, w_dec_p = prepare_sae_params(w_enc, b_enc, w_dec)

    # Exercise both the k-sparsified path and the k=None (dense) path.
    for kk in (k, None):
        sp, rec = jax.block_until_ready(
            topk_sae_forward(x, w_enc_p, b_enc_p, w_dec_p,
                             d=input_dim, h=hidden_dim, k=kk))
        sp_r, rec_r = _reference_forward(x, w_enc, b_enc, w_dec, kk)
        assert sp.shape == (B, hidden_dim) and rec.shape == (B, input_dim)
        assert jnp.allclose(sp, sp_r, atol=2e-3, rtol=2e-3), \
            float(jnp.max(jnp.abs(sp - sp_r)))
        assert jnp.allclose(rec, rec_r, atol=2e-3, rtol=2e-3), \
            float(jnp.max(jnp.abs(rec - rec_r)))
        if kk is not None:
            # at most k nonzero features per row
            assert int(jnp.max(jnp.sum(sp != 0, axis=-1))) <= kk

    print("KERNEL_OK")
</pallas_src>

<mosaic_0001>
module attributes {stable_mosaic.version = 11 : i64} {
  func.func @_sae_kernel(%arg0: i32, %arg1: memref<8x128xbf16, #tpu.memory_space<vmem>>, %arg2: memref<128x128xbf16, #tpu.memory_space<vmem>>, %arg3: memref<1x128xf32, #tpu.memory_space<vmem>>, %arg4: memref<128x128xbf16, #tpu.memory_space<vmem>>, %arg5: memref<8x128xf32, #tpu.memory_space<vmem>>, %arg6: memref<8x128xf32, #tpu.memory_space<vmem>>) attributes {dimension_semantics = [#tpu.dimension_semantics<parallel>], iteration_bounds = array<i64: 1>, scalar_prefetch = 0 : i64, scratch_operands = 0 : i64, tpu.core_type = #tpu.core_type<tc>, window_params = [{transform_indices = @transform_0, window_bounds = array<i64: 8, 128>}, {pipeline_mode = #tpu.pipeline_mode<synchronous>, transform_indices = @transform_1, window_bounds = array<i64: 128, 128>}, {pipeline_mode = #tpu.pipeline_mode<synchronous>, transform_indices = @transform_2, window_bounds = array<i64: 1, 128>}, {pipeline_mode = #tpu.pipeline_mode<synchronous>, transform_indices = @transform_3, window_bounds = array<i64: 128, 128>}, {transform_indices = @transform_4, window_bounds = array<i64: 8, 128>}, {transform_indices = @transform_5, window_bounds = array<i64: 8, 128>}]} {
    %c0 = arith.constant 0 : index
    %c0_0 = arith.constant 0 : index
    %0 = vector.load %arg2[%c0, %c0_0] : memref<128x128xbf16, #tpu.memory_space<vmem>>, vector<128x128xbf16>
    %c0_1 = arith.constant 0 : index
    %c0_2 = arith.constant 0 : index
    %1 = vector.load %arg4[%c0_1, %c0_2] : memref<128x128xbf16, #tpu.memory_space<vmem>>, vector<128x128xbf16>
    %c0_3 = arith.constant 0 : index
    %c0_4 = arith.constant 0 : index
    %2 = vector.load %arg3[%c0_3, %c0_4] : memref<1x128xf32, #tpu.memory_space<vmem>>, vector<1x128xf32>
    %c0_5 = arith.constant 0 : index
    %c0_6 = arith.constant 0 : index
    %3 = vector.load %arg1[%c0_5, %c0_6] : memref<8x128xbf16, #tpu.memory_space<vmem>>, vector<8x128xbf16>
    %cst = arith.constant dense<0.000000e+00> : vector<8x128xf32>
    %4 = tpu.matmul %3, %0, %cst {dimension_numbers = #tpu.dot_dimension_numbers<[1], [1], [0], [0], [0, 0, 1, 0], [], []>} : vector<8x128xbf16>, vector<128x128xbf16>, vector<8x128xf32> -> vector<8x128xf32>
    %5 = vector.broadcast %2 : vector<1x128xf32> to vector<8x128xf32>
    %6 = arith.addf %4, %5 : vector<8x128xf32>
    %cst_7 = arith.constant 0.000000e+00 : f32
    %7 = vector.broadcast %cst_7 : f32 to vector<8x128xf32>
    %8 = arith.maximumf %6, %7 : vector<8x128xf32>
    %9 = tpu.iota {dimensions = array<i32: 1>} : vector<8x128xi32>
    %cst_8 = arith.constant -1.000000e+00 : f32
    %c0_i32 = arith.constant 0 : i32
    %cst_9 = arith.constant dense<0xFF800000> : vector<8xf32>
    %10 = vector.multi_reduction <maximumf>, %8, %cst_9 [1] : vector<8x128xf32> to vector<8xf32>
    %11 = vector.shape_cast %10 : vector<8xf32> to vector<8x1xf32>
    %12 = vector.broadcast %11 : vector<8x1xf32> to vector<8x128xf32>
    %13 = arith.cmpf oeq, %8, %12 : vector<8x128xf32>
    %c128_i32 = arith.constant 128 : i32
    %14 = vector.broadcast %c128_i32 : i32 to vector<8x128xi32>
    %15 = arith.select %13, %9, %14 : vector<8x128xi1>, vector<8x128xi32>
    %cst_10 = arith.constant dense<2147483647> : vector<8xi32>
    %16 = vector.multi_reduction <minsi>, %15, %cst_10 [1] : vector<8x128xi32> to vector<8xi32>
    %17 = vector.shape_cast %16 : vector<8xi32> to vector<8x1xi32>
    %18 = vector.broadcast %17 : vector<8x1xi32> to vector<8x128xi32>
    %19 = arith.cmpi eq, %9, %18 : vector<8x128xi32>
    %20 = vector.broadcast %cst_8 : f32 to vector<8x128xf32>
    %21 = arith.select %19, %20, %8 : vector<8x128xi1>, vector<8x128xf32>
    %c1_i32 = arith.constant 1 : i32
    %cst_11 = arith.constant dense<0xFF800000> : vector<8xf32>
    %22 = vector.multi_reduction <maximumf>, %21, %cst_11 [1] : vector<8x128xf32> to vector<8xf32>
    %23 = vector.shape_cast %22 : vector<8xf32> to vector<8x1xf32>
    %24 = vector.broadcast %23 : vector<8x1xf32> to vector<8x128xf32>
    %25 = arith.cmpf oeq, %21, %24 : vector<8x128xf32>
    %c128_i32_12 = arith.constant 128 : i32
    %26 = vector.broadcast %c128_i32_12 : i32 to vector<8x128xi32>
    %27 = arith.select %25, %9, %26 : vector<8x128xi1>, vector<8x128xi32>
    %cst_13 = arith.constant dense<2147483647> : vector<8xi32>
    %28 = vector.multi_reduction <minsi>, %27, %cst_13 [1] : vector<8x128xi32> to vector<8xi32>
    %29 = vector.shape_cast %28 : vector<8xi32> to vector<8x1xi32>
    %30 = vector.broadcast %29 : vector<8x1xi32> to vector<8x128xi32>
    %31 = arith.cmpi eq, %9, %30 : vector<8x128xi32>
    %32 = vector.broadcast %cst_8 : f32 to vector<8x128xf32>
    %33 = arith.select %31, %32, %21 : vector<8x128xi1>, vector<8x128xf32>
    %c2_i32 = arith.constant 2 : i32
    %cst_14 = arith.constant dense<0xFF800000> : vector<8xf32>
    %34 = vector.multi_reduction <maximumf>, %33, %cst_14 [1] : vector<8x128xf32> to vector<8xf32>
    %35 = vector.shape_cast %34 : vector<8xf32> to vector<8x1xf32>
    %36 = vector.broadcast %35 : vector<8x1xf32> to vector<8x128xf32>
    %37 = arith.cmpf oeq, %33, %36 : vector<8x128xf32>
    %c128_i32_15 = arith.constant 128 : i32
    %38 = vector.broadcast %c128_i32_15 : i32 to vector<8x128xi32>
    %39 = arith.select %37, %9, %38 : vector<8x128xi1>, vector<8x128xi32>
    %cst_16 = arith.constant dense<2147483647> : vector<8xi32>
    %40 = vector.multi_reduction <minsi>, %39, %cst_16 [1] : vector<8x128xi32> to vector<8xi32>
    %41 = vector.shape_cast %40 : vector<8xi32> to vector<8x1xi32>
    %42 = vector.broadcast %41 : vector<8x1xi32> to vector<8x128xi32>
    %43 = arith.cmpi eq, %9, %42 : vector<8x128xi32>
    %44 = vector.broadcast %cst_8 : f32 to vector<8x128xf32>
    %45 = arith.select %43, %44, %33 : vector<8x128xi1>, vector<8x128xf32>
    %c3_i32 = arith.constant 3 : i32
    %cst_17 = arith.constant dense<0xFF800000> : vector<8xf32>
    %46 = vector.multi_reduction <maximumf>, %45, %cst_17 [1] : vector<8x128xf32> to vector<8xf32>
    %47 = vector.shape_cast %46 : vector<8xf32> to vector<8x1xf32>
    %48 = vector.broadcast %47 : vector<8x1xf32> to vector<8x128xf32>
    %49 = arith.cmpf oeq, %45, %48 : vector<8x128xf32>
    %c128_i32_18 = arith.constant 128 : i32
    %50 = vector.broadcast %c128_i32_18 : i32 to vector<8x128xi32>
    %51 = arith.select %49, %9, %50 : vector<8x128xi1>, vector<8x128xi32>
    %cst_19 = arith.constant dense<2147483647> : vector<8xi32>
    %52 = vector.multi_reduction <minsi>, %51, %cst_19 [1] : vector<8x128xi32> to vector<8xi32>
    %53 = vector.shape_cast %52 : vector<8xi32> to vector<8x1xi32>
    %54 = vector.broadcast %53 : vector<8x1xi32> to vector<8x128xi32>
    %55 = arith.cmpi eq, %9, %54 : vector<8x128xi32>
    %56 = vector.broadcast %cst_8 : f32 to vector<8x128xf32>
    %57 = arith.select %55, %56, %45 : vector<8x128xi1>, vector<8x128xf32>
    %c4_i32 = arith.constant 4 : i32
    %cst_20 = arith.constant dense<0xFF800000> : vector<8xf32>
    %58 = vector.multi_reduction <maximumf>, %57, %cst_20 [1] : vector<8x128xf32> to vector<8xf32>
    %59 = vector.shape_cast %58 : vector<8xf32> to vector<8x1xf32>
    %60 = vector.broadcast %59 : vector<8x1xf32> to vector<8x128xf32>
    %61 = arith.cmpf oeq, %57, %60 : vector<8x128xf32>
    %c128_i32_21 = arith.constant 128 : i32
    %62 = vector.broadcast %c128_i32_21 : i32 to vector<8x128xi32>
    %63 = arith.select %61, %9, %62 : vector<8x128xi1>, vector<8x128xi32>
    %cst_22 = arith.constant dense<2147483647> : vector<8xi32>
    %64 = vector.multi_reduction <minsi>, %63, %cst_22 [1] : vector<8x128xi32> to vector<8xi32>
    %65 = vector.shape_cast %64 : vector<8xi32> to vector<8x1xi32>
    %66 = vector.broadcast %65 : vector<8x1xi32> to vector<8x128xi32>
    %67 = arith.cmpi eq, %9, %66 : vector<8x128xi32>
    %68 = vector.broadcast %cst_8 : f32 to vector<8x128xf32>
    %69 = arith.select %67, %68, %57 : vector<8x128xi1>, vector<8x128xf32>
    %c5_i32 = arith.constant 5 : i32
    %cst_23 = arith.constant dense<0xFF800000> : vector<8xf32>
    %70 = vector.multi_reduction <maximumf>, %69, %cst_23 [1] : vector<8x128xf32> to vector<8xf32>
    %71 = vector.shape_cast %70 : vector<8xf32> to vector<8x1xf32>
    %72 = vector.broadcast %71 : vector<8x1xf32> to vector<8x128xf32>
    %73 = arith.cmpf oeq, %69, %72 : vector<8x128xf32>
    %c128_i32_24 = arith.constant 128 : i32
    %74 = vector.broadcast %c128_i32_24 : i32 to vector<8x128xi32>
    %75 = arith.select %73, %9, %74 : vector<8x128xi1>, vector<8x128xi32>
    %cst_25 = arith.constant dense<2147483647> : vector<8xi32>
    %76 = vector.multi_reduction <minsi>, %75, %cst_25 [1] : vector<8x128xi32> to vector<8xi32>
    %77 = vector.shape_cast %76 : vector<8xi32> to vector<8x1xi32>
    %78 = vector.broadcast %77 : vector<8x1xi32> to vector<8x128xi32>
    %79 = arith.cmpi eq, %9, %78 : vector<8x128xi32>
    %80 = vector.broadcast %cst_8 : f32 to vector<8x128xf32>
    %81 = arith.select %79, %80, %69 : vector<8x128xi1>, vector<8x128xf32>
    %c6_i32 = arith.constant 6 : i32
    %cst_26 = arith.constant dense<0xFF800000> : vector<8xf32>
    %82 = vector.multi_reduction <maximumf>, %81, %cst_26 [1] : vector<8x128xf32> to vector<8xf32>
    %83 = vector.shape_cast %82 : vector<8xf32> to vector<8x1xf32>
    %84 = vector.broadcast %83 : vector<8x1xf32> to vector<8x128xf32>
    %85 = arith.cmpf oeq, %81, %84 : vector<8x128xf32>
    %c128_i32_27 = arith.constant 128 : i32
    %86 = vector.broadcast %c128_i32_27 : i32 to vector<8x128xi32>
    %87 = arith.select %85, %9, %86 : vector<8x128xi1>, vector<8x128xi32>
    %cst_28 = arith.constant dense<2147483647> : vector<8xi32>
    %88 = vector.multi_reduction <minsi>, %87, %cst_28 [1] : vector<8x128xi32> to vector<8xi32>
    %89 = vector.shape_cast %88 : vector<8xi32> to vector<8x1xi32>
    %90 = vector.broadcast %89 : vector<8x1xi32> to vector<8x128xi32>
    %91 = arith.cmpi eq, %9, %90 : vector<8x128xi32>
    %92 = vector.broadcast %cst_8 : f32 to vector<8x128xf32>
    %93 = arith.select %91, %92, %81 : vector<8x128xi1>, vector<8x128xf32>
    %c7_i32 = arith.constant 7 : i32
    %cst_29 = arith.constant dense<0xFF800000> : vector<8xf32>
    %94 = vector.multi_reduction <maximumf>, %93, %cst_29 [1] : vector<8x128xf32> to vector<8xf32>
    %95 = vector.shape_cast %94 : vector<8xf32> to vector<8x1xf32>
    %96 = vector.broadcast %95 : vector<8x1xf32> to vector<8x128xf32>
    %97 = arith.cmpf oeq, %93, %96 : vector<8x128xf32>
    %c128_i32_30 = arith.constant 128 : i32
    %98 = vector.broadcast %c128_i32_30 : i32 to vector<8x128xi32>
    %99 = arith.select %97, %9, %98 : vector<8x128xi1>, vector<8x128xi32>
    %cst_31 = arith.constant dense<2147483647> : vector<8xi32>
    %100 = vector.multi_reduction <minsi>, %99, %cst_31 [1] : vector<8x128xi32> to vector<8xi32>
    %101 = vector.shape_cast %100 : vector<8xi32> to vector<8x1xi32>
    %102 = vector.broadcast %101 : vector<8x1xi32> to vector<8x128xi32>
    %103 = arith.cmpi eq, %9, %102 : vector<8x128xi32>
    %104 = vector.broadcast %cst_8 : f32 to vector<8x128xf32>
    %105 = arith.select %103, %104, %93 : vector<8x128xi1>, vector<8x128xf32>
    %cst_32 = arith.constant -1.000000e+00 : f32
    %106 = vector.broadcast %cst_32 : f32 to vector<8x128xf32>
    %107 = arith.cmpf oeq, %105, %106 : vector<8x128xf32>
    %cst_33 = arith.constant 0.000000e+00 : f32
    %108 = vector.broadcast %cst_33 : f32 to vector<8x128xf32>
    %109 = arith.select %107, %8, %108 : vector<8x128xi1>, vector<8x128xf32>
    %c0_34 = arith.constant 0 : index
    %c0_35 = arith.constant 0 : index
    %110 = vector.load %arg5[%c0_34, %c0_35] : memref<8x128xf32, #tpu.memory_space<vmem>>, vector<8x128xf32>
    tpu.vector_store %arg5[%c0_34, %c0_35], %109 {strides = array<i32>} : memref<8x128xf32, #tpu.memory_space<vmem>>, vector<8x128xf32>,
    %111 = arith.truncf %109 : vector<8x128xf32> to vector<8x128xbf16>
    %cst_36 = arith.constant dense<0.000000e+00> : vector<8x128xf32>
    %112 = tpu.matmul %111, %1, %cst_36 {dimension_numbers = #tpu.dot_dimension_numbers<[1], [1], [0], [0], [0, 0, 1, 0], [], []>} : vector<8x128xbf16>, vector<128x128xbf16>, vector<8x128xf32> -> vector<8x128xf32>
    %c0_37 = arith.constant 0 : index
    %c0_38 = arith.constant 0 : index
    %113 = vector.load %arg6[%c0_37, %c0_38] : memref<8x128xf32, #tpu.memory_space<vmem>>, vector<8x128xf32>
    tpu.vector_store %arg6[%c0_37, %c0_38], %112 {strides = array<i32>} : memref<8x128xf32, #tpu.memory_space<vmem>>, vector<8x128xf32>,
    return
  }
  func.func @transform_0(%arg0: i32) -> (i32, i32) {
    %c0_i32 = arith.constant 0 : i32
    %c0_i32_0 = arith.constant 0 : i32
    return %arg0, %c0_i32 : i32, i32
  }
  func.func @transform_1(%arg0: i32) -> (i32, i32) {
    %c0_i32 = arith.constant 0 : i32
    %c0_i32_0 = arith.constant 0 : i32
    %c0_i32_1 = arith.constant 0 : i32
    return %c0_i32, %c0_i32_0 : i32, i32
  }
  func.func @transform_2(%arg0: i32) -> (i32, i32) {
    %c0_i32 = arith.constant 0 : i32
    %c0_i32_0 = arith.constant 0 : i32
    %c0_i32_1 = arith.constant 0 : i32
    return %c0_i32, %c0_i32_0 : i32, i32
  }
  func.func @transform_3(%arg0: i32) -> (i32, i32) {
    %c0_i32 = arith.constant 0 : i32
    %c0_i32_0 = arith.constant 0 : i32
    %c0_i32_1 = arith.constant 0 : i32
    return %c0_i32, %c0_i32_0 : i32, i32
  }
  func.func @transform_4(%arg0: i32) -> (i32, i32) {
    %c0_i32 = arith.constant 0 : i32
    %c0_i32_0 = arith.constant 0 : i32
    return %arg0, %c0_i32 : i32, i32
  }
  func.func @transform_5(%arg0: i32) -> (i32, i32) {
    %c0_i32 = arith.constant 0 : i32
    %c0_i32_0 = arith.constant 0 : i32
    return %arg0, %c0_i32 : i32, i32
  }
}

</mosaic_0001>

<llo_original>
// kernel: topk_sae_forward.1
$region0: #{topk_sae_forward.1}
  #allocation0 [shape = 'u32[]', space=smem, size = 0x4, offset = 0x4, fixed_abs, tag = 'smem constant byte address 0x4 - core index']
  #allocation1 [shape = 'u32[144,128]{1,0:T(1,128)}', space=vmem, size = 0x12000, scoped, tag = 'internal scratch']
  %s0 = inlined_call_operand.vmem [shape: bf16[8,128], index: 0, kind: input, shape index: {}]
  %s1 = inlined_call_operand.hbm [shape: bf16[128,128], index: 1, kind: input, shape index: {}]
  %s2 = inlined_call_operand.vmem [shape: f32[1,128], index: 2, kind: input, shape index: {}]
  %s3 = inlined_call_operand.hbm [shape: bf16[128,128], index: 3, kind: input, shape index: {}]
  %s4 = inlined_call_operand.hbm [shape: f32[8,128], index: 4, kind: output, shape index: {0}]
  %s5 = inlined_call_operand.hbm [shape: f32[8,128], index: 5, kind: output, shape index: {1}]
  %6 = xla_tuple %s4, %s5
  %s7 = sld [smem:[#allocation0]]
  $region42: #{topk_sae_forward.1} parent=0
    _
  %s9 = ssub.s32 1, %s7
  %s10 = scalar_select 0, %s9, %s7
  $region1: #{topk_sae_forward.1} parent=0
    #allocation2 [shape = 'u8[32768]{0}', space=vmem, size = 0x8000, scoped, tag = 'input window, operand 1, single buffered']
    #allocation3 [shape = 's32[1]{0}', space=sflag, size = 0x4, scoped, tag = 'scoped memory for topk_sae_forward.1']
    #allocation4 [shape = 's32[1]{0}', space=sflag, size = 0x4, scoped, tag = 'scoped memory for topk_sae_forward.1']
    #allocation5 [shape = 'u8[32768]{0}', space=vmem, size = 0x8000, scoped, tag = 'input window, operand 3, single buffered']
    #allocation6 [shape = 's32[1]{0}', space=sflag, size = 0x4, scoped, tag = 'scoped memory for topk_sae_forward.1']
    #allocation7 [shape = 'u8[4096]{0}', space=vmem, size = 0x1000, scoped, tag = 'output window, operand 0, single buffered']
    #allocation8 [shape = 'u8[4096]{0}', space=vmem, size = 0x1000, scoped, tag = 'output window, operand 1, single buffered']
    #allocation9 [shape = 's32[1]{0}', space=sflag, size = 0x4, scoped, tag = 'scoped memory for topk_sae_forward.1']
    %11 = vsyncpa [#allocation3], 0
    %12 = vsyncpa [#allocation6], 0
    %13 = vsyncpa [#allocation4], 0
    %14 = vsyncpa [#allocation9], 0
    // Predicated region
    $region2: #{topk_sae_forward.1} parent=1 // pred_check
      _
    $region3: #{topk_sae_forward.1} parent=1 // pred_check_branch
      %16 = sbr.rel (0) target = $region5
    $region4: #{topk_sae_forward.1} parent=1 // pred_region
      _
    $region5: #{topk_sae_forward.1} parent=1 // pred_fallthru
      _
    // Predicated region
    $region6: #{topk_sae_forward.1} parent=1 // pred_check
      _
    $region7: #{topk_sae_forward.1} parent=1 // pred_check_branch
      %18 = sbr.rel (0) target = $region9
    $region8: #{topk_sae_forward.1} parent=1 // pred_region
      %s20 = ssub.s32 1024, 1024
      %21 = vsyncadd [#allocation3], %s20
      %s22 = sshll.u32 [#allocation2], 4
      %s23 = int_to_ptr.vmem [resolvable:$true] %s22
      %28 = dma.hbm_to_vmem [thread:$0]  %s1, 1024, %s23, [#allocation3], 64, 64, 4
    $region9: #{topk_sae_forward.1} parent=1 // pred_fallthru
      _
    // Predicated region
    $region10: #{topk_sae_forward.1} parent=1 // pred_check
      _
    $region11: #{topk_sae_forward.1} parent=1 // pred_check_branch
      %30 = sbr.rel (0) target = $region13
    $region12: #{topk_sae_forward.1} parent=1 // pred_region
      _
    $region13: #{topk_sae_forward.1} parent=1 // pred_fallthru
      _
    // Predicated region
    $region14: #{topk_sae_forward.1} parent=1 // pred_check
      _
    $region15: #{topk_sae_forward.1} parent=1 // pred_check_branch
      %32 = sbr.rel (0) target = $region17
    $region16: #{topk_sae_forward.1} parent=1 // pred_region
      %s34 = ssub.s32 1024, 1024
      %35 = vsyncadd [#allocation6], %s34
      %s36 = sshll.u32 [#allocation5], 4
      %s37 = int_to_ptr.vmem [resolvable:$true] %s36
      %42 = dma.hbm_to_vmem [thread:$0]  %s3, 1024, %s37, [#allocation6], 64, 64, 4
    $region17: #{topk_sae_forward.1} parent=1 // pred_fallthru
      _
    // Predicated region
    $region18: #{topk_sae_forward.1} parent=1 // pred_check
      _
    $region19: #{topk_sae_forward.1} parent=1 // pred_check_branch
      %44 = sbr.rel (0) target = $region21
    $region20: #{topk_sae_forward.1} parent=1 // pred_region
      %45 = dma.done [#allocation3], 1024
    $region21: #{topk_sae_forward.1} parent=1 // pred_fallthru
      _
    // Predicated region
    $region22: #{topk_sae_forward.1} parent=1 // pred_check
      _
    $region23: #{topk_sae_forward.1} parent=1 // pred_check_branch
      %47 = sbr.rel (0) target = $region25
    $region24: #{topk_sae_forward.1} parent=1 // pred_region
      %48 = dma.done [#allocation6], 1024
    $region25: #{topk_sae_forward.1} parent=1 // pred_fallthru
      _
    %v50 = vld [vmem:[#allocation2] sm:$0xf]
    %v51 = vld [vmem:[#allocation2 + $0x4] sm:$0xf]
    %v52 = vld [vmem:[#allocation2 + $0x8] sm:$0xf]
    %v53 = vld [vmem:[#allocation2 + $0xc] sm:$0xf]
    %v54 = vld [vmem:[#allocation2 + $0x10] sm:$0xf]
    %v55 = vld [vmem:[#allocation2 + $0x14] sm:$0xf]
    %v56 = vld [vmem:[#allocation2 + $0x18] sm:$0xf]
    %v57 = vld [vmem:[#allocation2 + $0x1c] sm:$0xf]
    %v58 = vld [vmem:[#allocation2 + $0x20] sm:$0xf]
    %v59 = vld [vmem:[#allocation2 + $0x24] sm:$0xf]
    %v60 = vld [vmem:[#allocation2 + $0x28] sm:$0xf]
    %v61 = vld [vmem:[#allocation2 + $0x2c] sm:$0xf]
    %v62 = vld [vmem:[#allocation2 + $0x30] sm:$0xf]
    %v63 = vld [vmem:[#allocation2 + $0x34] sm:$0xf]
    %v64 = vld [vmem:[#allocation2 + $0x38] sm:$0xf]
    %v65 = vld [vmem:[#allocation2 + $0x3c] sm:$0xf]
    %v66 = vld [vmem:[#allocation5] sm:$0xf]
    %v67 = vld [vmem:[#allocation5 + $0x4] sm:$0xf]
    %v68 = vld [vmem:[#allocation5 + $0x8] sm:$0xf]
    %v69 = vld [vmem:[#allocation5 + $0xc] sm:$0xf]
    %v70 = vld [vmem:[#allocation5 + $0x10] sm:$0xf]
    %v71 = vld [vmem:[#allocation5 + $0x14] sm:$0xf]
    %v72 = vld [vmem:[#allocation5 + $0x18] sm:$0xf]
    %v73 = vld [vmem:[#allocation5 + $0x1c] sm:$0xf]
    %v74 = vld [vmem:[#allocation5 + $0x20] sm:$0xf]
    %v75 = vld [vmem:[#allocation5 + $0x24] sm:$0xf]
    %v76 = vld [vmem:[#allocation5 + $0x28] sm:$0xf]
    %v77 = vld [vmem:[#allocation5 + $0x2c] sm:$0xf]
    %v78 = vld [vmem:[#allocation5 + $0x30] sm:$0xf]
    %v79 = vld [vmem:[#allocation5 + $0x34] sm:$0xf]
    %v80 = vld [vmem:[#allocation5 + $0x38] sm:$0xf]
    %v81 = vld [vmem:[#allocation5 + $0x3c] sm:$0xf]
    %v82 = vld [vmem:[%s2] sm:$0x1]
    %v83 = vld [vmem:[%s0] sm:$0xf]
    %v85 = vlaneseq
    %v86 = vshrl.u32 %v85, 7
    %v87 = vsub.s32 0, %v86
    %v88 = vrot.slane %v82, %v87
    %v106 = vunpack.c.l.b16 %v50
    %v107 = vunpack.c.l.b16 %v51
    %v108 = vunpack.c.l.b16 %v52
    %v109 = vunpack.c.l.b16 %v53
    %v110 = vunpack.c.l.b16 %v54
    %v111 = vunpack.c.l.b16 %v55
    %v112 = vunpack.c.l.b16 %v56
    %v113 = vunpack.c.l.b16 %v57
    %v114 = vunpack.c.l.b16 %v58
    %v115 = vunpack.c.l.b16 %v59
    %v116 = vunpack.c.l.b16 %v60
    %v117 = vunpack.c.l.b16 %v61
    %v118 = vunpack.c.l.b16 %v62
    %v119 = vunpack.c.l.b16 %v63
    %v120 = vunpack.c.l.b16 %v64
    %v121 = vunpack.c.l.b16 %v65
    %v122 = vpack.c.b16 %v107, %v106
    %v123 = vpack.c.b16 %v109, %v108
    %v124 = vpack.c.b16 %v111, %v110
    %v125 = vpack.c.b16 %v113, %v112
    %v126 = vpack.c.b16 %v115, %v114
    %v127 = vpack.c.b16 %v117, %v116
    %v128 = vpack.c.b16 %v119, %v118
    %v129 = vpack.c.b16 %v121, %v120
    %138 = vmatprep.subr.bf16.mxu0 0
    %139 = vmatpush1.bf16.xpose.msra.mxu0 %v122
    %140 = vmatprep.subr.bf16.mxu0 0
    %141 = vmatpush1.bf16.xpose.msra.mxu0 %v123
    %142 = vmatprep.subr.bf16.mxu0 0
    %143 = vmatpush1.bf16.xpose.msra.mxu0 %v124
    %144 = vmatprep.subr.bf16.mxu0 0
    %145 = vmatpush1.bf16.xpose.msra.mxu0 %v125
    %146 = vmatprep.subr.bf16.mxu0 0
    %147 = vmatpush1.bf16.xpose.msra.mxu0 %v126
    %148 = vmatprep.subr.bf16.mxu0 0
    %149 = vmatpush1.bf16.xpose.msra.mxu0 %v127
    %150 = vmatprep.subr.bf16.mxu0 0
    %151 = vmatpush1.bf16.xpose.msra.mxu0 %v128
    %152 = vmatprep.subr.bf16.mxu0 0
    %153 = vmatpush1.bf16.xpose.msra.mxu0 %v129
    %154 = vmatprep.subr.bf16.mxu0 0
    %155 = vmatpush1.bf16.xpose.msra.mxu0 0
    %156 = vmatprep.subr.bf16.mxu0 0
    %157 = vmatpush1.bf16.xpose.msra.mxu0 0
    %158 = vmatprep.subr.bf16.mxu0 0
    %159 = vmatpush1.bf16.xpose.msra.mxu0 0
    %160 = vmatprep.subr.bf16.mxu0 0
    %161 = vmatpush1.bf16.xpose.msra.mxu0 0
    %162 = vmatprep.subr.bf16.mxu0 0
    %163 = vmatpush1.bf16.xpose.msra.mxu0 0
    %164 = vmatprep.subr.bf16.mxu0 0
    %165 = vmatpush1.bf16.xpose.msra.mxu0 0
    %166 = vmatprep.subr.bf16.mxu0 0
    %167 = vmatpush1.bf16.xpose.msra.mxu0 0
    %168 = vmatprep.subr.bf16.mxu0 0
    %169 = vmatpush1.bf16.xpose.msra.mxu0 0
    %170 = vmatprep.mubr.bf16.mxu0 0
    %171 = vmatmul.mubr.bf16.gmra.mrb[0].mxu0 %v83
    %v172 = vpop.f32.mrb[0].mxu0
    %v173 = vadd.f32 %v88, %v172
    %v174 = vpop.f32.mrb[0].mxu0
    %v175 = vpop.f32.mrb[0].mxu0
    %v176 = vpop.f32.mrb[0].mxu0
    %177 = vdwg.mxu0
    %v178 = vmax.f32 %v173, 0.0
    %v179 = vlaneseq
    %v180 = vand.u32 %v179, 127
    %181 = vmax.xlane.f32.xlu0 %v178
    %v182 = vpop.xlane.xlu0 %181
    %vm183 = vcmp.eq.f32.partialorder %v178, %v182
    %v184 = vsel %vm183, %v180, 128
    %v185 = vand.u32 %v184, 65535
    %v186 = vshra.s32 %v184, 16
    %v187 = vcvt.s32.f32 %v185
    %v188 = vcvt.s32.f32 %v186
    %189 = vmin.xlane.f32.xlu0 %v188
    %v190 = vpop.xlane.xlu0 %189
    %vm191 = vcmp.eq.f32.partialorder %v188, %v190
    %v192 = vsel %vm191, %v187, inf
    %193 = vmin.xlane.f32.xlu0 %v192
    %v194 = vpop.xlane.xlu0 %193
    %v195 = vcvt.f32.s32 %v194
    %v196 = vcvt.f32.s32 %v190
    %v197 = vshll.u32 %v196, 16
    %v198 = vadd.s32 %v197, %v195
    %vm199 = vcmp.eq.s32.totalorder %v180, %v198
    %v200 = vsel %vm199, -1.0, %v178
    %201 = vmax.xlane.f32.xlu0 %v200
    %v202 = vpop.xlane.xlu0 %201
    %vm203 = vcmp.eq.f32.partialorder %v200, %v202
    %v204 = vsel %vm203, %v180, 128
    %v205 = vand.u32 %v204, 65535
    %v206 = vshra.s32 %v204, 16
    %v207 = vcvt.s32.f32 %v205
    %v208 = vcvt.s32.f32 %v206
    %209 = vmin.xlane.f32.xlu0 %v208
    %v210 = vpop.xlane.xlu0 %209
    %vm211 = vcmp.eq.f32.partialorder %v208, %v210
    %v212 = vsel %vm211, %v207, inf
    %213 = vmin.xlane.f32.xlu0 %v212
    %v214 = vpop.xlane.xlu0 %213
    %v215 = vcvt.f32.s32 %v214
    %v216 = vcvt.f32.s32 %v210
    %v217 = vshll.u32 %v216, 16
    %v218 = vadd.s32 %v217, %v215
    %vm219 = vcmp.eq.s32.totalorder %v180, %v218
    %v220 = vsel %vm219, -1.0, %v200
    %221 = vmax.xlane.f32.xlu0 %v220
    %v222 = vpop.xlane.xlu0 %221
    %vm223 = vcmp.eq.f32.partialorder %v220, %v222
    %v224 = vsel %vm223, %v180, 128
    %v225 = vand.u32 %v224, 65535
    %v226 = vshra.s32 %v224, 16
    %v227 = vcvt.s32.f32 %v225
    %v228 = vcvt.s32.f32 %v226
    %229 = vmin.xlane.f32.xlu0 %v228
    %v230 = vpop.xlane.xlu0 %229
    %vm231 = vcmp.eq.f32.partialorder %v228, %v230
    %v232 = vsel %vm231, %v227, inf
    %233 = vmin.xlane.f32.xlu0 %v232
    %v234 = vpop.xlane.xlu0 %233
    %v235 = vcvt.f32.s32 %v234
    %v236 = vcvt.f32.s32 %v230
    %v237 = vshll.u32 %v236, 16
    %v238 = vadd.s32 %v237, %v235
    %vm239 = vcmp.eq.s32.totalorder %v180, %v238
    %v240 = vsel %vm239, -1.0, %v220
    %241 = vmax.xlane.f32.xlu0 %v240
    %v242 = vpop.xlane.xlu0 %241
    %vm243 = vcmp.eq.f32.partialorder %v240, %v242
    %v244 = vsel %vm243, %v180, 128
    %v245 = vand.u32 %v244, 65535
    %v246 = vshra.s32 %v244, 16
    %v247 = vcvt.s32.f32 %v245
    %v248 = vcvt.s32.f32 %v246
    %249 = vmin.xlane.f32.xlu0 %v248
    %v250 = vpop.xlane.xlu0 %249
    %vm251 = vcmp.eq.f32.partialorder %v248, %v250
    %v252 = vsel %vm251, %v247, inf
    %253 = vmin.xlane.f32.xlu0 %v252
    %v254 = vpop.xlane.xlu0 %253
    %v255 = vcvt.f32.s32 %v254
    %v256 = vcvt.f32.s32 %v250
    %v257 = vshll.u32 %v256, 16
    %v258 = vadd.s32 %v257, %v255
    %vm259 = vcmp.eq.s32.totalorder %v180, %v258
    %v260 = vsel %vm259, -1.0, %v240
    %261 = vmax.xlane.f32.xlu0 %v260
    %v262 = vpop.xlane.xlu0 %261
    %vm263 = vcmp.eq.f32.partialorder %v260, %v262
    %v264 = vsel %vm263, %v180, 128
    %v265 = vand.u32 %v264, 65535
    %v266 = vshra.s32 %v264, 16
    %v267 = vcvt.s32.f32 %v265
    %v268 = vcvt.s32.f32 %v266
    %269 = vmin.xlane.f32.xlu0 %v268
    %v270 = vpop.xlane.xlu0 %269
    %vm271 = vcmp.eq.f32.partialorder %v268, %v270
    %v272 = vsel %vm271, %v267, inf
    %273 = vmin.xlane.f32.xlu0 %v272
    %v274 = vpop.xlane.xlu0 %273
    %v275 = vcvt.f32.s32 %v274
    %v276 = vcvt.f32.s32 %v270
    %v277 = vshll.u32 %v276, 16
    %v278 = vadd.s32 %v277, %v275
    %vm279 = vcmp.eq.s32.totalorder %v180, %v278
    %v280 = vsel %vm279, -1.0, %v260
    %281 = vmax.xlane.f32.xlu0 %v280
    %v282 = vpop.xlane.xlu0 %281
    %vm283 = vcmp.eq.f32.partialorder %v280, %v282
    %v284 = vsel %vm283, %v180, 128
    %v285 = vand.u32 %v284, 65535
    %v286 = vshra.s32 %v284, 16
    %v287 = vcvt.s32.f32 %v285
    %v288 = vcvt.s32.f32 %v286
    %289 = vmin.xlane.f32.xlu0 %v288
    %v290 = vpop.xlane.xlu0 %289
    %vm291 = vcmp.eq.f32.partialorder %v288, %v290
    %v292 = vsel %vm291, %v287, inf
    %293 = vmin.xlane.f32.xlu0 %v292
    %v294 = vpop.xlane.xlu0 %293
    %v295 = vcvt.f32.s32 %v294
    %v296 = vcvt.f32.s32 %v290
    %v297 = vshll.u32 %v296, 16
    %v298 = vadd.s32 %v297, %v295
    %vm299 = vcmp.eq.s32.totalorder %v180, %v298
    %v300 = vsel %vm299, -1.0, %v280
    %301 = vmax.xlane.f32.xlu0 %v300
    %v302 = vpop.xlane.xlu0 %301
    %vm303 = vcmp.eq.f32.partialorder %v300, %v302
    %v304 = vsel %vm303, %v180, 128
    %v305 = vand.u32 %v304, 65535
    %v306 = vshra.s32 %v304, 16
    %v307 = vcvt.s32.f32 %v305
    %v308 = vcvt.s32.f32 %v306
    %309 = vmin.xlane.f32.xlu0 %v308
    %v310 = vpop.xlane.xlu0 %309
    %vm311 = vcmp.eq.f32.partialorder %v308, %v310
    %v312 = vsel %vm311, %v307, inf
    %313 = vmin.xlane.f32.xlu0 %v312
    %v314 = vpop.xlane.xlu0 %313
    %v315 = vcvt.f32.s32 %v314
    %v316 = vcvt.f32.s32 %v310
    %v317 = vshll.u32 %v316, 16
    %v318 = vadd.s32 %v317, %v315
    %vm319 = vcmp.eq.s32.totalorder %v180, %v318
    %v320 = vsel %vm319, -1.0, %v300
    %321 = vmax.xlane.f32.xlu0 %v320
    %v322 = vpop.xlane.xlu0 %321
    %vm323 = vcmp.eq.f32.partialorder %v320, %v322
    %v324 = vsel %vm323, %v180, 128
    %v325 = vand.u32 %v324, 65535
    %v326 = vshra.s32 %v324, 16
    %v327 = vcvt.s32.f32 %v325
    %v328 = vcvt.s32.f32 %v326
    %329 = vmin.xlane.f32.xlu0 %v328
    %v330 = vpop.xlane.xlu0 %329
    %vm331 = vcmp.eq.f32.partialorder %v328, %v330
    %v332 = vsel %vm331, %v327, inf
    %333 = vmin.xlane.f32.xlu0 %v332
    %v334 = vpop.xlane.xlu0 %333
    %v335 = vcvt.f32.s32 %v334
    %v336 = vcvt.f32.s32 %v330
    %v337 = vshll.u32 %v336, 16
    %v338 = vadd.s32 %v337, %v335
    %vm339 = vcmp.eq.s32.totalorder %v180, %v338
    %v340 = vsel %vm339, -1.0, %v320
    %vm341 = vcmp.eq.f32.partialorder %v340, -1.0
    %v342 = vsel %vm341, %v178, 0.0
    %343 = vst [vmem:[#allocation7] sm:$0xff] %v342
    %v344 = vpack.c.bf16 %v342, %v342
    %v361 = vunpack.c.l.b16 %v66
    %v362 = vunpack.c.l.b16 %v67
    %v363 = vunpack.c.l.b16 %v68
    %v364 = vunpack.c.l.b16 %v69
    %v365 = vunpack.c.l.b16 %v70
    %v366 = vunpack.c.l.b16 %v71
    %v367 = vunpack.c.l.b16 %v72
    %v368 = vunpack.c.l.b16 %v73
    %v369 = vunpack.c.l.b16 %v74
    %v370 = vunpack.c.l.b16 %v75
    %v371 = vunpack.c.l.b16 %v76
    %v372 = vunpack.c.l.b16 %v77
    %v373 = vunpack.c.l.b16 %v78
    %v374 = vunpack.c.l.b16 %v79
    %v375 = vunpack.c.l.b16 %v80
    %v376 = vunpack.c.l.b16 %v81
    %v377 = vpack.c.b16 %v362, %v361
    %v378 = vpack.c.b16 %v364, %v363
    %v379 = vpack.c.b16 %v366, %v365
    %v380 = vpack.c.b16 %v368, %v367
    %v381 = vpack.c.b16 %v370, %v369
    %v382 = vpack.c.b16 %v372, %v371
    %v383 = vpack.c.b16 %v374, %v373
    %v384 = vpack.c.b16 %v376, %v375
    %393 = vmatprep.subr.bf16.mxu0 0
    %394 = vmatpush1.bf16.xpose.msra.mxu0 %v377
    %395 = vmatprep.subr.bf16.mxu0 0
    %396 = vmatpush1.bf16.xpose.msra.mxu0 %v378
    %397 = vmatprep.subr.bf16.mxu0 0
    %398 = vmatpush1.bf16.xpose.msra.mxu0 %v379
    %399 = vmatprep.subr.bf16.mxu0 0
    %400 = vmatpush1.bf16.xpose.msra.mxu0 %v380
    %401 = vmatprep.subr.bf16.mxu0 0
    %402 = vmatpush1.bf16.xpose.msra.mxu0 %v381
    %403 = vmatprep.subr.bf16.mxu0 0
    %404 = vmatpush1.bf16.xpose.msra.mxu0 %v382
    %405 = vmatprep.subr.bf16.mxu0 0
    %406 = vmatpush1.bf16.xpose.msra.mxu0 %v383
    %407 = vmatprep.subr.bf16.mxu0 0
    %408 = vmatpush1.bf16.xpose.msra.mxu0 %v384
    %409 = vmatprep.subr.bf16.mxu0 0
    %410 = vmatpush1.bf16.xpose.msra.mxu0 0
    %411 = vmatprep.subr.bf16.mxu0 0
    %412 = vmatpush1.bf16.xpose.msra.mxu0 0
    %413 = vmatprep.subr.bf16.mxu0 0
    %414 = vmatpush1.bf16.xpose.msra.mxu0 0
    %415 = vmatprep.subr.bf16.mxu0 0
    %416 = vmatpush1.bf16.xpose.msra.mxu0 0
    %417 = vmatprep.subr.bf16.mxu0 0
    %418 = vmatpush1.bf16.xpose.msra.mxu0 0
    %419 = vmatprep.subr.bf16.mxu0 0
    %420 = vmatpush1.bf16.xpose.msra.mxu0 0
    %421 = vmatprep.subr.bf16.mxu0 0
    %422 = vmatpush1.bf16.xpose.msra.mxu0 0
    %423 = vmatprep.subr.bf16.mxu0 0
    %424 = vmatpush1.bf16.xpose.msra.mxu0 0
    %425 = vmatprep.mubr.bf16.mxu0 0
    %426 = vmatmul.mubr.bf16.gmra.mrb[0].mxu0 %v344
    %v427 = vpop.f32.mrb[0].mxu0
    %v428 = vadd.f32 0.0, %v427
    %v429 = vpop.f32.mrb[0].mxu0
    %v430 = vpop.f32.mrb[0].mxu0
    %v431 = vpop.f32.mrb[0].mxu0
    %432 = vdwg.mxu0
    %433 = vst [vmem:[#allocation8] sm:$0xff] %v428
    // Predicated region
    $region26: #{topk_sae_forward.1} parent=1 // pred_check
      _
    $region27: #{topk_sae_forward.1} parent=1 // pred_check_branch
      %435 = sbr.rel (0) target = $region29
    $region28: #{topk_sae_forward.1} parent=1 // pred_region
      %s437 = ssub.s32 128, 128
      %438 = vsyncadd [#allocation4], %s437
      %s440 = sshll.u32 [#allocation7], 4
      %s441 = int_to_ptr.vmem [resolvable:$true] %s440
      %443 = dma.vmem_to_hbm [thread:$0]  %s441, 128, %s4, [#allocation4]
    $region29: #{topk_sae_forward.1} parent=1 // pred_fallthru
      _
    // Predicated region
    $region30: #{topk_sae_forward.1} parent=1 // pred_check
      _
    $region31: #{topk_sae_forward.1} parent=1 // pred_check_branch
      %445 = sbr.rel (0) target = $region33
    $region32: #{topk_sae_forward.1} parent=1 // pred_region
      %s447 = ssub.s32 128, 128
      %448 = vsyncadd [#allocation9], %s447
      %s450 = sshll.u32 [#allocation8], 4
      %s451 = int_to_ptr.vmem [resolvable:$true] %s450
      %453 = dma.vmem_to_hbm [thread:$0]  %s451, 128, %s5, [#allocation9]
    $region33: #{topk_sae_forward.1} parent=1 // pred_fallthru
      _
    // Predicated region
    $region34: #{topk_sae_forward.1} parent=1 // pred_check
      _
    $region35: #{topk_sae_forward.1} parent=1 // pred_check_branch
      %455 = sbr.rel (0) target = $region37
    $region36: #{topk_sae_forward.1} parent=1 // pred_region
      %456 = dma.done [#allocation4], 128
    $region37: #{topk_sae_forward.1} parent=1 // pred_fallthru
      _
    // Predicated region
    $region38: #{topk_sae_forward.1} parent=1 // pred_check
      _
    $region39: #{topk_sae_forward.1} parent=1 // pred_check_branch
      %458 = sbr.rel (0) target = $region41
    $region40: #{topk_sae_forward.1} parent=1 // pred_region
      %459 = dma.done [#allocation9], 128
    $region41: #{topk_sae_forward.1} parent=1 // pred_fallthru
      _
    %460 = vsyncpa [#allocation3], 1
    %461 = vsyncpa [#allocation6], 1
    %462 = vsyncpa [#allocation4], 1
    %463 = vsyncpa [#allocation9], 1

</llo_original>
